<compile_context>
chip_gen: v7x
topology: tpu7x:2x2x1
jax: 0.10.0
libtpu: 0.0.40
codegen_flags: <defaults>
</compile_context>

<pallas_src>
import functools

import jax
import jax.numpy as jnp
from jax.experimental import pallas as pl
from jax.experimental.pallas import tpu as pltpu

LANE = 128


def _round_up(v, m):
    return ((v + m - 1) // m) * m


# ----------------------------- Pallas kernel ------------------------------ #
def symm_loss_kernel(x_ref, wall_ref, b1_ref, w2row_ref, out_ref, *, n_gens, hp):
    x = x_ref[...]          # (TB, Dp)                 f32 or bf16 (MXU operand)
    wall = wall_ref[...]    # (Dp, (n_gens+1)*Hp)      f32 or bf16 (MXU operand)
    b1 = b1_ref[...]        # (1, Hp)                  f32
    w2r = w2row_ref[...]    # (1, Hp)                  f32

    # One wide MXU matmul: cols [0:Hp] = hidden pre-activation,
    # cols [(n+1)*Hp:(n+2)*Hp] = x @ Wg_n (generator projection n).
    y = jnp.dot(x, wall, preferred_element_type=jnp.float32)   # (TB, (n+1)*Hp) f32

    h = jnp.tanh(y[:, :hp] + b1)                               # (TB, Hp) f32
    s = (1.0 - h * h) * w2r                                    # (TB, Hp) f32

    partial = jnp.float32(0.0)
    for n in range(n_gens):                                    # static, tiny
        xw = y[:, (n + 1) * hp:(n + 2) * hp]                   # lane-aligned slice
        diff = jnp.sum(s * xw, axis=-1, keepdims=True)         # (TB, 1)
        partial = partial + jnp.sum(diff * diff)

    # lane-dense (8,128) output block; wrapper reads element [i, 0, 0]
    out_ref[...] = jnp.broadcast_to(partial, (1, 8, 128)).astype(jnp.float32)


# ------------------------------- wrapper ---------------------------------- #
def symm_loss_pallas(x, w1, b1, w2, gens, *, block_b=512, use_bf16=False):
    """x: (B, D), w1: (D, H), b1: (H,), w2: (H, 1), gens: (n, d, d)."""
    B, D = x.shape
    D2, H = w1.shape
    n_gens, d, d2 = gens.shape
    assert D2 == D and d2 == d
    assert D % d == 0, "feature dim D must be divisible by generator dim d"
    N = D // d

    x = x.astype(jnp.float32)
    w1 = w1.astype(jnp.float32)
    gens = gens.astype(jnp.float32)

    # Fold generators into W1 (tiny, one-time XLA glue; no (n,B,D) buffers):
    #   Wg[n, k*d + j, a] = sum_h G[n, h, j] * W1[k*d + h, a]
    w13 = w1.reshape(N, d, H)
    wg = jnp.einsum("nhj,kha->nkja", gens, w13).reshape(n_gens, D, H)

    # Pad H -> Hp (lane multiple).  Padded hidden cols: h = tanh(0) = 0 and
    # w2 col = 0  =>  s col = 0  =>  no contribution.
    Hp = _round_up(H, LANE)
    b1p = jnp.pad(b1.astype(jnp.float32).reshape(1, H), ((0, 0), (0, Hp - H)))
    w2row = jnp.pad(w2.astype(jnp.float32).reshape(1, H), ((0, 0), (0, Hp - H)))
    if Hp != H:
        w1 = jnp.pad(w1, ((0, 0), (0, Hp - H)))
        wg = jnp.pad(wg, ((0, 0), (0, 0), (0, Hp - H)))

    # Pad D -> Dp (lane multiple).  Padded x feature columns are zero.
    Dp = _round_up(D, LANE)
    if Dp != D:
        x = jnp.pad(x, ((0, 0), (0, Dp - D)))
        w1 = jnp.pad(w1, ((0, Dp - D), (0, 0)))
        wg = jnp.pad(wg, ((0, 0), (0, Dp - D), (0, 0)))

    # Stacked resident weight [W1 | Wg_0 | ... | Wg_{n-1}] : (Dp, (n+1)*Hp)
    wall = jnp.concatenate([w1] + [wg[n] for n in range(n_gens)], axis=1)
    Hall = (n_gens + 1) * Hp

    # MXU operands optionally bf16 (f32 accumulate); elementwise stays f32.
    mxu_dtype = jnp.bfloat16 if use_bf16 else jnp.float32
    isz = 2 if use_bf16 else 4
    row_mult = 16 if use_bf16 else 8

    # Balanced batch tiling; >= 2 tiles (v7x dual TensorCore) when B allows.
    nt = max(pl.cdiv(B, block_b), 2 if B >= 2 * row_mult else 1)
    TB = _round_up(pl.cdiv(B, nt), row_mult)

    # VMEM sizing against the real part capacity (v7x has only 64 MiB / TC).
    def _vmem_est(tb):
        return (2 * tb * Dp * isz           # x tile (double-buffered)
                + 2 * Dp * Hall * isz       # stacked weights (default 2 bufs)
                + 2 * 2 * Hp * 4            # b1, w2 row
                + 2 * 8 * 128 * 4           # output tile
                + 4 * tb * Hall             # in-kernel f32 y
                + 3 * 4 * tb * Hp)          # h / s / temporaries

    try:
        cap = int(0.75 * pltpu.get_tpu_info().vmem_capacity_bytes)
    except Exception:                        # pragma: no cover - fallback
        cap = 48 * 2 ** 20                   # safe on v5e/v6e/v7x
    while TB > row_mult and _vmem_est(TB) > cap:
        TB = max(row_mult, _round_up(TB // 2, row_mult))

    nt = pl.cdiv(B, TB)
    B_pad = nt * TB
    if B_pad != B:
        # Zero rows: y = 0  =>  every generator projection is 0  =>  diff = 0.
        x = jnp.pad(x, ((0, B_pad - B), (0, 0)))

    x_in = x.astype(mxu_dtype)
    wall_in = wall.astype(mxu_dtype)
    vmem_limit = int(min(cap, max(16 * 2 ** 20, 2 * _vmem_est(TB))))

    kernel = functools.partial(symm_loss_kernel, n_gens=n_gens, hp=Hp)
    partials = pl.pallas_call(
        kernel,
        out_shape=jax.ShapeDtypeStruct((nt, 8, 128), jnp.float32),
        grid=(nt,),
        in_specs=[
            pl.BlockSpec((TB, Dp), lambda i: (i, 0)),       # x tile (only stream)
            pl.BlockSpec((Dp, Hall), lambda i: (0, 0)),     # stacked W1|Wg (resident)
            pl.BlockSpec((1, Hp), lambda i: (0, 0)),        # b1
            pl.BlockSpec((1, Hp), lambda i: (0, 0)),        # w2 row
        ],
        out_specs=pl.BlockSpec((1, 8, 128), lambda i: (i, 0, 0)),
        compiler_params=pltpu.CompilerParams(
            dimension_semantics=("parallel",),
            vmem_limit_bytes=vmem_limit),
    )(x_in, wall_in, b1p, w2row)

    return jnp.sum(partials[:, 0, 0]) / jnp.float32(n_gens * B)


# ---------------------- pure-JAX reference (torch semantics) -------------- #
def _model_apply(params, x):
    h = jnp.tanh(x @ params["w1"] + params["b1"])
    return h @ params["w2"] + params["b2"]              # (B, 1) scalar rep


def symm_loss_ref(params, gens, x):
    grads = jax.grad(lambda xx: jnp.sum(_model_apply(params, xx)))(x)  # (B, D)
    n_gens, _, d = gens.shape
    B, D = x.shape
    N = D // d
    g3 = grads.reshape(B, N, d)
    gen_grads = jnp.einsum("nhd,BNh->nBNd", gens, g3).reshape(n_gens, B, D)
    diff = jnp.einsum("nBD,BD->nB", gen_grads, x)
    return jnp.mean(diff ** 2)


# --------------------------------- main ------------------------------------ #
if __name__ == "__main__":
    B, N, d, H, n_gens = 8, 4, 4, 32, 3
    D = N * d

    key = jax.random.PRNGKey(0)
    kx, kw1, kb1, kw2, kb2, kg = jax.random.split(key, 6)

    x = jax.random.normal(kx, (B, D), dtype=jnp.float32)
    w1 = jax.random.normal(kw1, (D, H), dtype=jnp.float32) * 0.3
    b1 = jax.random.normal(kb1, (H,), dtype=jnp.float32) * 0.1
    w2 = jax.random.normal(kw2, (H, 1), dtype=jnp.float32) * 0.3
    b2 = jax.random.normal(kb2, (1,), dtype=jnp.float32) * 0.1
    # deterministic antisymmetric generators (so(d)-like)
    raw = jax.random.normal(kg, (n_gens, d, d), dtype=jnp.float32)
    gens = raw - jnp.swapaxes(raw, -1, -2)

    params = {"w1": w1, "b1": b1, "w2": w2, "b2": b2}
    ref = symm_loss_ref(params, gens, x)

    # f32 MXU operands: tight match against the autograd reference.
    loss_f32 = jax.block_until_ready(symm_loss_pallas(x, w1, b1, w2, gens))
    assert jnp.allclose(loss_f32, ref, rtol=1e-4, atol=1e-6), (loss_f32, ref)

    # bf16 MXU operands / f32 accumulation: loosened tolerance.
    loss_bf16 = jax.block_until_ready(
        symm_loss_pallas(x, w1, b1, w2, gens, use_bf16=True))
    assert jnp.allclose(loss_bf16, ref, rtol=1e-1, atol=1e-3), (loss_bf16, ref)

    print("KERNEL_OK")
</pallas_src>

<mosaic_0001>
module attributes {stable_mosaic.version = 11 : i64} {
  func.func @symm_loss_kernel(%arg0: i32, %arg1: memref<8x128xf32, #tpu.memory_space<vmem>>, %arg2: memref<128x512xf32, #tpu.memory_space<vmem>>, %arg3: memref<1x128xf32, #tpu.memory_space<vmem>>, %arg4: memref<1x128xf32, #tpu.memory_space<vmem>>, %arg5: memref<1x8x128xf32, #tpu.memory_space<vmem>>) attributes {dimension_semantics = [#tpu.dimension_semantics<parallel>], iteration_bounds = array<i64: 1>, scalar_prefetch = 0 : i64, scratch_operands = 0 : i64, tpu.core_type = #tpu.core_type<tc>, window_params = [{transform_indices = @transform_0, window_bounds = array<i64: 8, 128>}, {pipeline_mode = #tpu.pipeline_mode<synchronous>, transform_indices = @transform_1, window_bounds = array<i64: 128, 512>}, {pipeline_mode = #tpu.pipeline_mode<synchronous>, transform_indices = @transform_2, window_bounds = array<i64: 1, 128>}, {pipeline_mode = #tpu.pipeline_mode<synchronous>, transform_indices = @transform_3, window_bounds = array<i64: 1, 128>}, {transform_indices = @transform_4, window_bounds = array<i64: 1, 8, 128>}]} {
    %c0 = arith.constant 0 : index
    %c0_0 = arith.constant 0 : index
    %0 = vector.load %arg1[%c0, %c0_0] : memref<8x128xf32, #tpu.memory_space<vmem>>, vector<8x128xf32>
    %c0_1 = arith.constant 0 : index
    %c0_2 = arith.constant 0 : index
    %1 = vector.load %arg2[%c0_1, %c0_2] : memref<128x512xf32, #tpu.memory_space<vmem>>, vector<128x512xf32>
    %c0_3 = arith.constant 0 : index
    %c0_4 = arith.constant 0 : index
    %2 = vector.load %arg3[%c0_3, %c0_4] : memref<1x128xf32, #tpu.memory_space<vmem>>, vector<1x128xf32>
    %c0_5 = arith.constant 0 : index
    %c0_6 = arith.constant 0 : index
    %3 = vector.load %arg4[%c0_5, %c0_6] : memref<1x128xf32, #tpu.memory_space<vmem>>, vector<1x128xf32>
    %cst = arith.constant dense<0.000000e+00> : vector<8x512xf32>
    %4 = tpu.matmul %0, %1, %cst {dimension_numbers = #tpu.dot_dimension_numbers<[1], [0], [0], [1], [0, 0, 1, 1], [], []>} : vector<8x128xf32>, vector<128x512xf32>, vector<8x512xf32> -> vector<8x512xf32>
    %5 = vector.extract_strided_slice %4 {offsets = [0, 0], sizes = [8, 128], strides = [1, 1]} : vector<8x512xf32> to vector<8x128xf32>
    %6 = vector.broadcast %2 : vector<1x128xf32> to vector<8x128xf32>
    %7 = arith.addf %5, %6 : vector<8x128xf32>
    %8 = math.tanh %7 : vector<8x128xf32>
    %9 = arith.mulf %8, %8 : vector<8x128xf32>
    %cst_7 = arith.constant 1.000000e+00 : f32
    %10 = vector.broadcast %cst_7 : f32 to vector<8x128xf32>
    %11 = arith.subf %10, %9 : vector<8x128xf32>
    %12 = vector.broadcast %3 : vector<1x128xf32> to vector<8x128xf32>
    %13 = arith.mulf %11, %12 : vector<8x128xf32>
    %14 = vector.extract_strided_slice %4 {offsets = [0, 128], sizes = [8, 128], strides = [1, 1]} : vector<8x512xf32> to vector<8x128xf32>
    %15 = arith.mulf %13, %14 : vector<8x128xf32>
    %cst_8 = arith.constant dense<0.000000e+00> : vector<8xf32>
    %16 = vector.multi_reduction <add>, %15, %cst_8 [1] : vector<8x128xf32> to vector<8xf32>
    %17 = vector.shape_cast %16 : vector<8xf32> to vector<8x1xf32>
    %18 = arith.mulf %17, %17 : vector<8x1xf32>
    %19 = vector.shape_cast %18 : vector<8x1xf32> to vector<1x8x1xf32>
    %cst_9 = arith.constant dense<0.000000e+00> : vector<1xf32>
    %20 = vector.multi_reduction <add>, %19, %cst_9 [1, 2] : vector<1x8x1xf32> to vector<1xf32>
    %21 = vector.shape_cast %20 : vector<1xf32> to vector<1x1x1xf32>
    %22 = vector.extract %21[0, 0, 0] : f32 from vector<1x1x1xf32>
    %cst_10 = arith.constant 0.000000e+00 : f32
    %23 = arith.addf %cst_10, %22 : f32
    %24 = vector.extract_strided_slice %4 {offsets = [0, 256], sizes = [8, 128], strides = [1, 1]} : vector<8x512xf32> to vector<8x128xf32>
    %25 = arith.mulf %13, %24 : vector<8x128xf32>
    %cst_11 = arith.constant dense<0.000000e+00> : vector<8xf32>
    %26 = vector.multi_reduction <add>, %25, %cst_11 [1] : vector<8x128xf32> to vector<8xf32>
    %27 = vector.shape_cast %26 : vector<8xf32> to vector<8x1xf32>
    %28 = arith.mulf %27, %27 : vector<8x1xf32>
    %29 = vector.shape_cast %28 : vector<8x1xf32> to vector<1x8x1xf32>
    %cst_12 = arith.constant dense<0.000000e+00> : vector<1xf32>
    %30 = vector.multi_reduction <add>, %29, %cst_12 [1, 2] : vector<1x8x1xf32> to vector<1xf32>
    %31 = vector.shape_cast %30 : vector<1xf32> to vector<1x1x1xf32>
    %32 = vector.extract %31[0, 0, 0] : f32 from vector<1x1x1xf32>
    %33 = arith.addf %23, %32 : f32
    %34 = vector.extract_strided_slice %4 {offsets = [0, 384], sizes = [8, 128], strides = [1, 1]} : vector<8x512xf32> to vector<8x128xf32>
    %35 = arith.mulf %13, %34 : vector<8x128xf32>
    %cst_13 = arith.constant dense<0.000000e+00> : vector<8xf32>
    %36 = vector.multi_reduction <add>, %35, %cst_13 [1] : vector<8x128xf32> to vector<8xf32>
    %37 = vector.shape_cast %36 : vector<8xf32> to vector<8x1xf32>
    %38 = arith.mulf %37, %37 : vector<8x1xf32>
    %39 = vector.shape_cast %38 : vector<8x1xf32> to vector<1x8x1xf32>
    %cst_14 = arith.constant dense<0.000000e+00> : vector<1xf32>
    %40 = vector.multi_reduction <add>, %39, %cst_14 [1, 2] : vector<1x8x1xf32> to vector<1xf32>
    %41 = vector.shape_cast %40 : vector<1xf32> to vector<1x1x1xf32>
    %42 = vector.extract %41[0, 0, 0] : f32 from vector<1x1x1xf32>
    %43 = arith.addf %33, %42 : f32
    %44 = vector.broadcast %43 : f32 to vector<1x8x128xf32>
    %c0_15 = arith.constant 0 : index
    %c0_16 = arith.constant 0 : index
    %c0_17 = arith.constant 0 : index
    %45 = vector.load %arg5[%c0_15, %c0_16, %c0_17] : memref<1x8x128xf32, #tpu.memory_space<vmem>>, vector<1x8x128xf32>
    tpu.vector_store %arg5[%c0_15, %c0_16, %c0_17], %44 {strides = array<i32>} : memref<1x8x128xf32, #tpu.memory_space<vmem>>, vector<1x8x128xf32>,
    return
  }
  func.func @transform_0(%arg0: i32) -> (i32, i32) {
    %c0_i32 = arith.constant 0 : i32
    %c0_i32_0 = arith.constant 0 : i32
    return %arg0, %c0_i32 : i32, i32
  }
  func.func @transform_1(%arg0: i32) -> (i32, i32) {
    %c0_i32 = arith.constant 0 : i32
    %c0_i32_0 = arith.constant 0 : i32
    %c0_i32_1 = arith.constant 0 : i32
    return %c0_i32, %c0_i32_0 : i32, i32
  }
  func.func @transform_2(%arg0: i32) -> (i32, i32) {
    %c0_i32 = arith.constant 0 : i32
    %c0_i32_0 = arith.constant 0 : i32
    %c0_i32_1 = arith.constant 0 : i32
    return %c0_i32, %c0_i32_0 : i32, i32
  }
  func.func @transform_3(%arg0: i32) -> (i32, i32) {
    %c0_i32 = arith.constant 0 : i32
    %c0_i32_0 = arith.constant 0 : i32
    %c0_i32_1 = arith.constant 0 : i32
    return %c0_i32, %c0_i32_0 : i32, i32
  }
  func.func @transform_4(%arg0: i32) -> (i32, i32, i32) {
    %c0_i32 = arith.constant 0 : i32
    %c0_i32_0 = arith.constant 0 : i32
    %c0_i32_1 = arith.constant 0 : i32
    return %arg0, %c0_i32, %c0_i32_0 : i32, i32, i32
  }
}

</mosaic_0001>

<llo_original>
// kernel: tpu_custom_call.1
$region0: #{tpu_custom_call.1}
  #allocation0 [shape = 'u32[]', space=smem, size = 0x4, offset = 0x4, fixed_abs, tag = 'smem constant byte address 0x4 - core index']
  #allocation1 [shape = 'u32[144,128]{1,0:T(1,128)}', space=vmem, size = 0x12000, scoped, tag = 'internal scratch']
  %s0 = inlined_call_operand.hbm [shape: f32[8,128], index: 0, kind: input, shape index: {}]
  %s1 = inlined_call_operand.hbm [shape: f32[128,512], index: 1, kind: input, shape index: {}]
  %s2 = inlined_call_operand.vmem [shape: f32[1,128], index: 2, kind: input, shape index: {}]
  %s3 = inlined_call_operand.vmem [shape: f32[1,128], index: 3, kind: input, shape index: {}]
  %s4 = inlined_call_operand.hbm [shape: f32[1,8,128], index: 4, kind: output, shape index: {}]
  %s5 = sld [smem:[#allocation0]]
  $region34: #{tpu_custom_call.1} parent=0
    _
  %s7 = ssub.s32 1, %s5
  %s8 = scalar_select 0, %s7, %s5
  $region1: #{tpu_custom_call.1} parent=0
    #allocation2 [shape = 'u8[4096]{0}', space=vmem, size = 0x1000, scoped, tag = 'input window, operand 0, single buffered']
    #allocation3 [shape = 's32[1]{0}', space=sflag, size = 0x4, scoped, tag = 'scoped memory for tpu_custom_call.1']
    #allocation4 [shape = 's32[1]{0}', space=sflag, size = 0x4, scoped, tag = 'scoped memory for tpu_custom_call.1']
    #allocation5 [shape = 'u8[262144]{0}', space=vmem, size = 0x40000, scoped, tag = 'input window, operand 1, single buffered']
    #allocation6 [shape = 's32[1]{0}', space=sflag, size = 0x4, scoped, tag = 'scoped memory for tpu_custom_call.1']
    #allocation7 [shape = 'u8[4096]{0}', space=vmem, size = 0x1000, scoped, tag = 'output window, operand 0, single buffered']
    %9 = vsyncpa [#allocation3], 0
    %10 = vsyncpa [#allocation6], 0
    %11 = vsyncpa [#allocation4], 0
    // Predicated region
    $region2: #{tpu_custom_call.1} parent=1 // pred_check
      _
    $region3: #{tpu_custom_call.1} parent=1 // pred_check_branch
      %13 = sbr.rel (0) target = $region5
    $region4: #{tpu_custom_call.1} parent=1 // pred_region
      %s15 = ssub.s32 128, 128
      %16 = vsyncadd [#allocation3], %s15
      %s18 = sshll.u32 [#allocation2], 4
      %s19 = int_to_ptr.vmem [resolvable:$true] %s18
      %21 = dma.hbm_to_vmem [thread:$0]  %s0, 128, %s19, [#allocation3]
    $region5: #{tpu_custom_call.1} parent=1 // pred_fallthru
      _
    // Predicated region
    $region6: #{tpu_custom_call.1} parent=1 // pred_check
      _
    $region7: #{tpu_custom_call.1} parent=1 // pred_check_branch
      %23 = sbr.rel (0) target = $region9
    $region8: #{tpu_custom_call.1} parent=1 // pred_region
      %s25 = ssub.s32 8192, 8192
      %26 = vsyncadd [#allocation6], %s25
      %s27 = sshll.u32 [#allocation5], 4
      %s28 = int_to_ptr.vmem [resolvable:$true] %s27
      %33 = dma.hbm_to_vmem [thread:$0]  %s1, 8192, %s28, [#allocation6], 512, 512, 32
    $region9: #{tpu_custom_call.1} parent=1 // pred_fallthru
      _
    // Predicated region
    $region10: #{tpu_custom_call.1} parent=1 // pred_check
      _
    $region11: #{tpu_custom_call.1} parent=1 // pred_check_branch
      %35 = sbr.rel (0) target = $region13
    $region12: #{tpu_custom_call.1} parent=1 // pred_region
      _
    $region13: #{tpu_custom_call.1} parent=1 // pred_fallthru
      _
    // Predicated region
    $region14: #{tpu_custom_call.1} parent=1 // pred_check
      _
    $region15: #{tpu_custom_call.1} parent=1 // pred_check_branch
      %37 = sbr.rel (0) target = $region17
    $region16: #{tpu_custom_call.1} parent=1 // pred_region
      _
    $region17: #{tpu_custom_call.1} parent=1 // pred_fallthru
      _
    // Predicated region
    $region18: #{tpu_custom_call.1} parent=1 // pred_check
      _
    $region19: #{tpu_custom_call.1} parent=1 // pred_check_branch
      %39 = sbr.rel (0) target = $region21
    $region20: #{tpu_custom_call.1} parent=1 // pred_region
      %40 = dma.done [#allocation3], 128
    $region21: #{tpu_custom_call.1} parent=1 // pred_fallthru
      _
    // Predicated region
    $region22: #{tpu_custom_call.1} parent=1 // pred_check
      _
    $region23: #{tpu_custom_call.1} parent=1 // pred_check_branch
      %42 = sbr.rel (0) target = $region25
    $region24: #{tpu_custom_call.1} parent=1 // pred_region
      %43 = dma.done [#allocation6], 8192
    $region25: #{tpu_custom_call.1} parent=1 // pred_fallthru
      _
    %v44 = vld [vmem:[#allocation2] sm:$0xff]
    %v45 = vld [vmem:[#allocation5] sm:$0xff]
    %v46 = vld [vmem:[#allocation5 + $0x8] sm:$0xff]
    %v47 = vld [vmem:[#allocation5 + $0x10] sm:$0xff]
    %v48 = vld [vmem:[#allocation5 + $0x18] sm:$0xff]
    %v49 = vld [vmem:[#allocation5 + $0x20] sm:$0xff]
    %v50 = vld [vmem:[#allocation5 + $0x28] sm:$0xff]
    %v51 = vld [vmem:[#allocation5 + $0x30] sm:$0xff]
    %v52 = vld [vmem:[#allocation5 + $0x38] sm:$0xff]
    %v53 = vld [vmem:[#allocation5 + $0x40] sm:$0xff]
    %v54 = vld [vmem:[#allocation5 + $0x48] sm:$0xff]
    %v55 = vld [vmem:[#allocation5 + $0x50] sm:$0xff]
    %v56 = vld [vmem:[#allocation5 + $0x58] sm:$0xff]
    %v57 = vld [vmem:[#allocation5 + $0x60] sm:$0xff]
    %v58 = vld [vmem:[#allocation5 + $0x68] sm:$0xff]
    %v59 = vld [vmem:[#allocation5 + $0x70] sm:$0xff]
    %v60 = vld [vmem:[#allocation5 + $0x78] sm:$0xff]
    %v61 = vld [vmem:[#allocation5 + $0x80] sm:$0xff]
    %v62 = vld [vmem:[#allocation5 + $0x88] sm:$0xff]
    %v63 = vld [vmem:[#allocation5 + $0x90] sm:$0xff]
    %v64 = vld [vmem:[#allocation5 + $0x98] sm:$0xff]
    %v65 = vld [vmem:[#allocation5 + $0xa0] sm:$0xff]
    %v66 = vld [vmem:[#allocation5 + $0xa8] sm:$0xff]
    %v67 = vld [vmem:[#allocation5 + $0xb0] sm:$0xff]
    %v68 = vld [vmem:[#allocation5 + $0xb8] sm:$0xff]
    %v69 = vld [vmem:[#allocation5 + $0xc0] sm:$0xff]
    %v70 = vld [vmem:[#allocation5 + $0xc8] sm:$0xff]
    %v71 = vld [vmem:[#allocation5 + $0xd0] sm:$0xff]
    %v72 = vld [vmem:[#allocation5 + $0xd8] sm:$0xff]
    %v73 = vld [vmem:[#allocation5 + $0xe0] sm:$0xff]
    %v74 = vld [vmem:[#allocation5 + $0xe8] sm:$0xff]
    %v75 = vld [vmem:[#allocation5 + $0xf0] sm:$0xff]
    %v76 = vld [vmem:[#allocation5 + $0xf8] sm:$0xff]
    %v77 = vld [vmem:[#allocation5 + $0x100] sm:$0xff]
    %v78 = vld [vmem:[#allocation5 + $0x108] sm:$0xff]
    %v79 = vld [vmem:[#allocation5 + $0x110] sm:$0xff]
    %v80 = vld [vmem:[#allocation5 + $0x118] sm:$0xff]
    %v81 = vld [vmem:[#allocation5 + $0x120] sm:$0xff]
    %v82 = vld [vmem:[#allocation5 + $0x128] sm:$0xff]
    %v83 = vld [vmem:[#allocation5 + $0x130] sm:$0xff]
    %v84 = vld [vmem:[#allocation5 + $0x138] sm:$0xff]
    %v85 = vld [vmem:[#allocation5 + $0x140] sm:$0xff]
    %v86 = vld [vmem:[#allocation5 + $0x148] sm:$0xff]
    %v87 = vld [vmem:[#allocation5 + $0x150] sm:$0xff]
    %v88 = vld [vmem:[#allocation5 + $0x158] sm:$0xff]
    %v89 = vld [vmem:[#allocation5 + $0x160] sm:$0xff]
    %v90 = vld [vmem:[#allocation5 + $0x168] sm:$0xff]
    %v91 = vld [vmem:[#allocation5 + $0x170] sm:$0xff]
    %v92 = vld [vmem:[#allocation5 + $0x178] sm:$0xff]
    %v93 = vld [vmem:[#allocation5 + $0x180] sm:$0xff]
    %v94 = vld [vmem:[#allocation5 + $0x188] sm:$0xff]
    %v95 = vld [vmem:[#allocation5 + $0x190] sm:$0xff]
    %v96 = vld [vmem:[#allocation5 + $0x198] sm:$0xff]
    %v97 = vld [vmem:[#allocation5 + $0x1a0] sm:$0xff]
    %v98 = vld [vmem:[#allocation5 + $0x1a8] sm:$0xff]
    %v99 = vld [vmem:[#allocation5 + $0x1b0] sm:$0xff]
    %v100 = vld [vmem:[#allocation5 + $0x1b8] sm:$0xff]
    %v101 = vld [vmem:[#allocation5 + $0x1c0] sm:$0xff]
    %v102 = vld [vmem:[#allocation5 + $0x1c8] sm:$0xff]
    %v103 = vld [vmem:[#allocation5 + $0x1d0] sm:$0xff]
    %v104 = vld [vmem:[#allocation5 + $0x1d8] sm:$0xff]
    %v105 = vld [vmem:[#allocation5 + $0x1e0] sm:$0xff]
    %v106 = vld [vmem:[#allocation5 + $0x1e8] sm:$0xff]
    %v107 = vld [vmem:[#allocation5 + $0x1f0] sm:$0xff]
    %v108 = vld [vmem:[#allocation5 + $0x1f8] sm:$0xff]
    %v109 = vld [vmem:[%s2] sm:$0x1]
    %v110 = vld [vmem:[%s3] sm:$0x1]
    %111 = vmatprep.subr.mxu0 %v46
    %112 = vmatpush1.msra.mxu0 %v45
    %113 = vmatprep.subr.mxu0 %v50
    %114 = vmatpush1.msra.mxu0 %v49
    %115 = vmatprep.subr.mxu0 %v54
    %116 = vmatpush1.msra.mxu0 %v53
    %117 = vmatprep.subr.mxu0 %v58
    %118 = vmatpush1.msra.mxu0 %v57
    %119 = vmatprep.subr.mxu0 %v62
    %120 = vmatpush1.msra.mxu0 %v61
    %121 = vmatprep.subr.mxu0 %v66
    %122 = vmatpush1.msra.mxu0 %v65
    %123 = vmatprep.subr.mxu0 %v70
    %124 = vmatpush1.msra.mxu0 %v69
    %125 = vmatprep.subr.mxu0 %v74
    %126 = vmatpush1.msra.mxu0 %v73
    %127 = vmatprep.subr.mxu0 %v78
    %128 = vmatpush1.msra.mxu0 %v77
    %129 = vmatprep.subr.mxu0 %v82
    %130 = vmatpush1.msra.mxu0 %v81
    %131 = vmatprep.subr.mxu0 %v86
    %132 = vmatpush1.msra.mxu0 %v85
    %133 = vmatprep.subr.mxu0 %v90
    %134 = vmatpush1.msra.mxu0 %v89
    %135 = vmatprep.subr.mxu0 %v94
    %136 = vmatpush1.msra.mxu0 %v93
    %137 = vmatprep.subr.mxu0 %v98
    %138 = vmatpush1.msra.mxu0 %v97
    %139 = vmatprep.subr.mxu0 %v102
    %140 = vmatpush1.msra.mxu0 %v101
    %141 = vmatprep.subr.mxu0 %v106
    %142 = vmatpush1.msra.mxu0 %v105
    %143 = vmatprep.subr.mxu0 0.0
    %144 = vmatpush1.msra.mxu0 0.0
    %145 = vmatprep.subr.mxu0 0.0
    %146 = vmatpush1.msra.mxu0 0.0
    %147 = vmatprep.subr.mxu0 0.0
    %148 = vmatpush1.msra.mxu0 0.0
    %149 = vmatprep.subr.mxu0 0.0
    %150 = vmatpush1.msra.mxu0 0.0
    %151 = vmatprep.subr.mxu0 0.0
    %152 = vmatpush1.msra.mxu0 0.0
    %153 = vmatprep.subr.mxu0 0.0
    %154 = vmatpush1.msra.mxu0 0.0
    %155 = vmatprep.subr.mxu0 0.0
    %156 = vmatpush1.msra.mxu0 0.0
    %157 = vmatprep.subr.mxu0 0.0
    %158 = vmatpush1.msra.mxu0 0.0
    %159 = vmatprep.subr.mxu0 0.0
    %160 = vmatpush1.msra.mxu0 0.0
    %161 = vmatprep.subr.mxu0 0.0
    %162 = vmatpush1.msra.mxu0 0.0
    %163 = vmatprep.subr.mxu0 0.0
    %164 = vmatpush1.msra.mxu0 0.0
    %165 = vmatprep.subr.mxu0 0.0
    %166 = vmatpush1.msra.mxu0 0.0
    %167 = vmatprep.subr.mxu0 0.0
    %168 = vmatpush1.msra.mxu0 0.0
    %169 = vmatprep.subr.mxu0 0.0
    %170 = vmatpush1.msra.mxu0 0.0
    %171 = vmatprep.subr.mxu0 0.0
    %172 = vmatpush1.msra.mxu0 0.0
    %173 = vmatprep.subr.mxu0 0.0
    %174 = vmatpush1.msra.mxu0 0.0
    %175 = vmatprep.mubr.f32.mxu0 0.0
    %176 = vmatmul.mubr.f32.gmra.mrb[0].mxu0 %v44
    %v177 = vpop.f32.mrb[0].mxu0
    %v178 = vadd.f32 0.0, %v177
    %v179 = vpop.f32.mrb[0].mxu0
    %v180 = vadd.f32 0.0, %v179
    %181 = vdwg.mxu0
    %182 = vmatprep.subr.mxu0 %v48
    %183 = vmatpush1.msra.mxu0 %v47
    %184 = vmatprep.subr.mxu0 %v52
    %185 = vmatpush1.msra.mxu0 %v51
    %186 = vmatprep.subr.mxu0 %v56
    %187 = vmatpush1.msra.mxu0 %v55
    %188 = vmatprep.subr.mxu0 %v60
    %189 = vmatpush1.msra.mxu0 %v59
    %190 = vmatprep.subr.mxu0 %v64
    %191 = vmatpush1.msra.mxu0 %v63
    %192 = vmatprep.subr.mxu0 %v68
    %193 = vmatpush1.msra.mxu0 %v67
    %194 = vmatprep.subr.mxu0 %v72
    %195 = vmatpush1.msra.mxu0 %v71
    %196 = vmatprep.subr.mxu0 %v76
    %197 = vmatpush1.msra.mxu0 %v75
    %198 = vmatprep.subr.mxu0 %v80
    %199 = vmatpush1.msra.mxu0 %v79
    %200 = vmatprep.subr.mxu0 %v84
    %201 = vmatpush1.msra.mxu0 %v83
    %202 = vmatprep.subr.mxu0 %v88
    %203 = vmatpush1.msra.mxu0 %v87
    %204 = vmatprep.subr.mxu0 %v92
    %205 = vmatpush1.msra.mxu0 %v91
    %206 = vmatprep.subr.mxu0 %v96
    %207 = vmatpush1.msra.mxu0 %v95
    %208 = vmatprep.subr.mxu0 %v100
    %209 = vmatpush1.msra.mxu0 %v99
    %210 = vmatprep.subr.mxu0 %v104
    %211 = vmatpush1.msra.mxu0 %v103
    %212 = vmatprep.subr.mxu0 %v108
    %213 = vmatpush1.msra.mxu0 %v107
    %214 = vmatprep.subr.mxu0 0.0
    %215 = vmatpush1.msra.mxu0 0.0
    %216 = vmatprep.subr.mxu0 0.0
    %217 = vmatpush1.msra.mxu0 0.0
    %218 = vmatprep.subr.mxu0 0.0
    %219 = vmatpush1.msra.mxu0 0.0
    %220 = vmatprep.subr.mxu0 0.0
    %221 = vmatpush1.msra.mxu0 0.0
    %222 = vmatprep.subr.mxu0 0.0
    %223 = vmatpush1.msra.mxu0 0.0
    %224 = vmatprep.subr.mxu0 0.0
    %225 = vmatpush1.msra.mxu0 0.0
    %226 = vmatprep.subr.mxu0 0.0
    %227 = vmatpush1.msra.mxu0 0.0
    %228 = vmatprep.subr.mxu0 0.0
    %229 = vmatpush1.msra.mxu0 0.0
    %230 = vmatprep.subr.mxu0 0.0
    %231 = vmatpush1.msra.mxu0 0.0
    %232 = vmatprep.subr.mxu0 0.0
    %233 = vmatpush1.msra.mxu0 0.0
    %234 = vmatprep.subr.mxu0 0.0
    %235 = vmatpush1.msra.mxu0 0.0
    %236 = vmatprep.subr.mxu0 0.0
    %237 = vmatpush1.msra.mxu0 0.0
    %238 = vmatprep.subr.mxu0 0.0
    %239 = vmatpush1.msra.mxu0 0.0
    %240 = vmatprep.subr.mxu0 0.0
    %241 = vmatpush1.msra.mxu0 0.0
    %242 = vmatprep.subr.mxu0 0.0
    %243 = vmatpush1.msra.mxu0 0.0
    %244 = vmatprep.subr.mxu0 0.0
    %245 = vmatpush1.msra.mxu0 0.0
    %246 = vmatprep.mubr.f32.mxu0 0.0
    %247 = vmatmul.mubr.f32.gmra.mrb[0].mxu0 %v44
    %v248 = vpop.f32.mrb[0].mxu0
    %v249 = vadd.f32 0.0, %v248
    %v250 = vpop.f32.mrb[0].mxu0
    %v251 = vadd.f32 0.0, %v250
    %252 = vdwg.mxu0
    %v254 = vlaneseq
    %v255 = vshrl.u32 %v254, 7
    %v256 = vsub.s32 0, %v255
    %v257 = vrot.slane %v109, %v256
    %v259 = vadd.f32 %v178, %v257
    %v260 = vtanh.pop %v259
    %v261 = vmul.f32 %v260, %v260
    %v262 = vsub.f32 1.0, %v261
    %v264 = vlaneseq
    %v265 = vshrl.u32 %v264, 7
    %v266 = vsub.s32 0, %v265
    %v267 = vrot.slane %v110, %v266
    %v269 = vmul.f32 %v262, %v267
    %v270 = vmul.f32 %v269, %v180
    %271 = vadd.xlane.f32.xlu0 %v270
    %v272 = vpop.xlane.xlu0 %271
    %v273 = vmul.f32 %v272, %v272
    %vm274 = vcmask 7168
    %v275 = vsel %vm274, %v273, 0.0
    %276 = vadd.xlane.f32.xlu0 %v275
    %v277 = vpop.xlane.xlu0 %276
    %v278 = vrot.slane %v277, 4
    %v279 = vadd.f32 %v277, %v278
    %v280 = vrot.slane %v279, 2
    %v281 = vadd.f32 %v279, %v280
    %v282 = vrot.slane %v281, 1
    %v283 = vadd.f32 %v281, %v282
    %s284 = vtos %v283
    %s285 = sadd.f32 %s284, 0.0
    %v286 = vmul.f32 %v269, %v249
    %287 = vadd.xlane.f32.xlu0 %v286
    %v288 = vpop.xlane.xlu0 %287
    %v289 = vmul.f32 %v288, %v288
    %v290 = vsel %vm274, %v289, 0.0
    %291 = vadd.xlane.f32.xlu0 %v290
    %v292 = vpop.xlane.xlu0 %291
    %v293 = vrot.slane %v292, 4
    %v294 = vadd.f32 %v292, %v293
    %v295 = vrot.slane %v294, 2
    %v296 = vadd.f32 %v294, %v295
    %v297 = vrot.slane %v296, 1
    %v298 = vadd.f32 %v296, %v297
    %s299 = vtos %v298
    %s300 = sadd.f32 %s285, %s299
    %v301 = vmul.f32 %v269, %v251
    %302 = vadd.xlane.f32.xlu0 %v301
    %v303 = vpop.xlane.xlu0 %302
    %v304 = vmul.f32 %v303, %v303
    %v305 = vsel %vm274, %v304, 0.0
    %306 = vadd.xlane.f32.xlu0 %v305
    %v307 = vpop.xlane.xlu0 %306
    %v308 = vrot.slane %v307, 4
    %v309 = vadd.f32 %v307, %v308
    %v310 = vrot.slane %v309, 2
    %v311 = vadd.f32 %v309, %v310
    %v312 = vrot.slane %v311, 1
    %v313 = vadd.f32 %v311, %v312
    %s314 = vtos %v313
    %s315 = sadd.f32 %s300, %s314
    %v316 = vstv %s315
    %317 = vst [vmem:[#allocation7] sm:$0xff] %v316
    // Predicated region
    $region26: #{tpu_custom_call.1} parent=1 // pred_check
      _
    $region27: #{tpu_custom_call.1} parent=1 // pred_check_branch
      %319 = sbr.rel (0) target = $region29
    $region28: #{tpu_custom_call.1} parent=1 // pred_region
      %s321 = ssub.s32 128, 128
      %322 = vsyncadd [#allocation4], %s321
      %s324 = sshll.u32 [#allocation7], 4
      %s325 = int_to_ptr.vmem [resolvable:$true] %s324
      %327 = dma.vmem_to_hbm [thread:$0]  %s325, 128, %s4, [#allocation4]
    $region29: #{tpu_custom_call.1} parent=1 // pred_fallthru
      _
    // Predicated region
    $region30: #{tpu_custom_call.1} parent=1 // pred_check
      _
    $region31: #{tpu_custom_call.1} parent=1 // pred_check_branch
      %329 = sbr.rel (0) target = $region33
    $region32: #{tpu_custom_call.1} parent=1 // pred_region
      %330 = dma.done [#allocation4], 128
    $region33: #{tpu_custom_call.1} parent=1 // pred_fallthru
      _
    %331 = vsyncpa [#allocation3], 1
    %332 = vsyncpa [#allocation6], 1
    %333 = vsyncpa [#allocation4], 1

</llo_original>
